<compile_context>
chip_gen: v6e
topology: v6e:2x2x1
jax: 0.10.0
libtpu: 0.0.40
codegen_flags: <defaults>
</compile_context>

<pallas_src>
import jax
import jax.numpy as jnp
from jax.experimental import pallas as pl
from jax.experimental.pallas import tpu as pltpu


def _copy_kernel(x_ref, o_ref):
    # Lane-dense (tm, tn) VMEM tiles; the rearrange itself is handled by the
    # wrapper-side (free, metadata-only) reshapes of contiguous data.
    o_ref[...] = x_ref[...]


def _vmem_capacity_bytes() -> int:
    """Per-core VMEM capacity; conservative fallback (v7x = 64 MiB/TC)."""
    try:
        info = pltpu.get_tpu_info()
        cap = int(getattr(info, "vmem_capacity_bytes", 0))
        if cap > 0:
            return cap
    except Exception:
        pass
    return 64 * 1024 * 1024


def _pick_view(total: int, fallback, lane_cap: int):
    """Factorize `total` as (R, L) with L a multiple of 128 if possible."""
    best = 0
    for k in range(1, min(total, lane_cap) // 128 + 1):
        cand = 128 * k
        if total % cand == 0:
            best = cand
    if best:
        return total // best, best
    # TODO(synk): total has no 128-multiple divisor; keep the natural
    # (B*O, C*H*W) view -- edge column blocks then use masked lane stores,
    # which is unavoidable for such shapes.
    return fallback


def _pick_block(R: int, L: int, itemsize: int, sublane: int,
                block_bytes_cap: int):
    """Pick (tm, tn) honoring the (sublane,128)-divisible / full-extent rule."""
    max_elems = max(sublane * 128, block_bytes_cap // itemsize)
    rows_min = min(R, sublane)
    # Column block: prefer the full width (fully-contiguous DMA per block);
    # otherwise tile columns in 128-multiples (edge block lane-masked).
    if rows_min * L <= max_elems:
        tn = L
    else:
        tn = min(L, max(128, (max_elems // rows_min) // 128 * 128))
    # Row block: fill the byte budget, dtype-aware sublane alignment.
    tm = max_elems // tn
    if tm >= R:
        tm = R                                  # full extent -> always legal
    else:
        tm = max(sublane, (tm // sublane) * sublane)
    return tm, tn


def shared_objects_to_batch(x: jax.Array, num_objects: int) -> jax.Array:
    """Pallas implementation of rearrange 'b (o c) h w -> (b o) c h w'."""
    B, OC, H, W = x.shape
    assert OC % num_objects == 0, "channel dim must be divisible by num_objects"
    O = num_objects
    C = OC // O
    out_shape = (B * O, C, H, W)

    total = x.size
    if total == 0:
        return x.reshape(out_shape)

    itemsize = jnp.dtype(x.dtype).itemsize
    # Sublane packing factor: 8 for 4-byte, 16 for bf16, 32 for int8/fp8.
    sublane = max(8, 32 // max(itemsize, 1))

    vmem_cap = _vmem_capacity_bytes()
    # 4 live buffers (in + out, double-buffered) plus headroom must fit VMEM
    # on every generation -> cap a single block at 8 MiB (or less on small
    # VMEM parts), floor of 1 MiB.
    max_block_bytes = min(8 << 20, max(1 << 20, (vmem_cap // 2) // 4))

    total_bytes = total * itemsize
    if total_bytes >= (4 << 20):
        # Aim for >= 8 pipeline steps so v7x megacore gets both TensorCores
        # busy and the DMA pipeline has iterations to overlap.
        block_bytes_cap = min(max_block_bytes, pl.cdiv(total_bytes, 8))
    else:
        block_bytes_cap = max_block_bytes       # tiny copy: few steps is fine

    max_elems = max(sublane * 128, block_bytes_cap // itemsize)
    # Lane width: large multiple of 128 (measured lane-density lever), but
    # small enough that a sublane-tall, full-width block fits the budget.
    lane_cap = min(32768, max(128, max_elems // sublane))

    R, L = _pick_view(total, (B * O, C * H * W), lane_cap)
    tm, tn = _pick_block(R, L, itemsize, sublane, block_bytes_cap)

    grid = (pl.cdiv(R, tm), pl.cdiv(L, tn))
    block_bytes = tm * tn * itemsize
    vmem_limit = int(min(vmem_cap, max(32 << 20, 4 * block_bytes + (8 << 20))))

    x2 = x.reshape(R, L)                        # free metadata-only reshape

    out2 = pl.pallas_call(
        _copy_kernel,
        out_shape=jax.ShapeDtypeStruct((R, L), x.dtype),
        grid=grid,
        in_specs=[pl.BlockSpec((tm, tn), lambda i, j: (i, j))],
        out_specs=pl.BlockSpec((tm, tn), lambda i, j: (i, j)),
        compiler_params=pltpu.CompilerParams(
            dimension_semantics=("parallel", "parallel"),
            vmem_limit_bytes=vmem_limit,
        ),
        cost_estimate=pl.CostEstimate(
            flops=0,
            transcendentals=0,
            bytes_accessed=2 * total_bytes,
        ),
    )(x2)

    # Free reshape back to the (B*O, C, H, W) output layout.
    return out2.reshape(out_shape)


if __name__ == "__main__":
    # Small deterministic example: B=2, num_objects=4, C=4, H=W=16
    B, O, C, H, W = 2, 4, 4, 16, 16
    key = jax.random.PRNGKey(0)
    x = jax.random.normal(key, (B, O * C, H, W), dtype=jnp.float32)

    out = shared_objects_to_batch(x, num_objects=O)
    out = jax.block_until_ready(out)

    # Reference: einops 'b (o c) h w -> (b o) c h w' on contiguous NCHW data
    # is exactly a reshape.
    ref = x.reshape(B * O, C, H, W)

    assert out.shape == (B * O, C, H, W), out.shape
    assert out.dtype == x.dtype
    assert jnp.array_equal(out, ref), "mismatch vs reference rearrange"

    print("KERNEL_OK")
</pallas_src>

<mosaic_0001>
module attributes {stable_mosaic.version = 11 : i64} {
  func.func @_copy_kernel(%arg0: i32, %arg1: i32, %arg2: memref<1x8192xf32, #tpu.memory_space<vmem>>, %arg3: memref<1x8192xf32, #tpu.memory_space<vmem>>) attributes {dimension_semantics = [#tpu.dimension_semantics<parallel>, #tpu.dimension_semantics<parallel>], iteration_bounds = array<i64: 1, 1>, scalar_prefetch = 0 : i64, scratch_operands = 0 : i64, tpu.core_type = #tpu.core_type<tc>, window_params = [{transform_indices = @transform_0, window_bounds = array<i64: 1, 8192>}, {transform_indices = @transform_1, window_bounds = array<i64: 1, 8192>}]} {
    %c0 = arith.constant 0 : index
    %c0_0 = arith.constant 0 : index
    %0 = vector.load %arg2[%c0, %c0_0] : memref<1x8192xf32, #tpu.memory_space<vmem>>, vector<1x8192xf32>
    %c0_1 = arith.constant 0 : index
    %c0_2 = arith.constant 0 : index
    %1 = vector.load %arg3[%c0_1, %c0_2] : memref<1x8192xf32, #tpu.memory_space<vmem>>, vector<1x8192xf32>
    tpu.vector_store %arg3[%c0_1, %c0_2], %0 {strides = array<i32>} : memref<1x8192xf32, #tpu.memory_space<vmem>>, vector<1x8192xf32>,
    return
  }
  func.func @transform_0(%arg0: i32, %arg1: i32) -> (i32, i32) {
    %c0_i32 = arith.constant 0 : i32
    return %arg0, %arg1 : i32, i32
  }
  func.func @transform_1(%arg0: i32, %arg1: i32) -> (i32, i32) {
    %c0_i32 = arith.constant 0 : i32
    return %arg0, %arg1 : i32, i32
  }
}

</mosaic_0001>

<llo_original>
// kernel: tpu_custom_call.1
$region0: #{tpu_custom_call.1}
  #allocation0 [shape = 'u32[]', space=smem, size = 0x4, offset = 0x4, fixed_abs, tag = 'smem constant byte address 0x4 - core index']
  #allocation1 [shape = 'u32[144,128]{1,0:T(1,128)}', space=vmem, size = 0x12000, scoped, tag = 'internal scratch']
  %s0 = inlined_call_operand.hbm [shape: f32[1,8192], index: 0, kind: input, shape index: {}]
  %s1 = inlined_call_operand.hbm [shape: f32[1,8192], index: 1, kind: output, shape index: {}]
  %s2 = sld [smem:[#allocation0]]
  $region18: #{tpu_custom_call.1} parent=0
    _
  %s4 = ssub.s32 1, %s2
  %s5 = scalar_select 0, %s4, %s2
  $region1: #{tpu_custom_call.1} parent=0
    #allocation2 [shape = 'u8[32768]{0}', space=vmem, size = 0x8000, scoped, tag = 'input window, operand 0, single buffered']
    #allocation3 [shape = 's32[1]{0}', space=sflag, size = 0x4, scoped, tag = 'scoped memory for tpu_custom_call.1']
    #allocation4 [shape = 's32[1]{0}', space=sflag, size = 0x4, scoped, tag = 'scoped memory for tpu_custom_call.1']
    #allocation5 [shape = 'u8[32768]{0}', space=vmem, size = 0x8000, scoped, tag = 'output window, operand 0, single buffered']
    %6 = vsyncpa [#allocation3], 0
    %7 = vsyncpa [#allocation4], 0
    // Predicated region
    $region2: #{tpu_custom_call.1} parent=1 // pred_check
      _
    $region3: #{tpu_custom_call.1} parent=1 // pred_check_branch
      %9 = sbr.rel (0) target = $region5
    $region4: #{tpu_custom_call.1} parent=1 // pred_region
      %s11 = ssub.s32 1024, 1024
      %12 = vsyncadd [#allocation3], %s11
      %s14 = sshll.u32 [#allocation2], 4
      %s15 = int_to_ptr.vmem [resolvable:$true] %s14
      %17 = dma.hbm_to_vmem [thread:$0]  %s0, 1024, %s15, [#allocation3]
    $region5: #{tpu_custom_call.1} parent=1 // pred_fallthru
      _
    // Predicated region
    $region6: #{tpu_custom_call.1} parent=1 // pred_check
      _
    $region7: #{tpu_custom_call.1} parent=1 // pred_check_branch
      %19 = sbr.rel (0) target = $region9
    $region8: #{tpu_custom_call.1} parent=1 // pred_region
      %20 = dma.done [#allocation3], 1024
    $region9: #{tpu_custom_call.1} parent=1 // pred_fallthru
      _
    %v21 = vld [vmem:[#allocation2] sm:$0xff]
    %v22 = vld [vmem:[#allocation2 + $0x8] sm:$0xff]
    %v23 = vld [vmem:[#allocation2 + $0x10] sm:$0xff]
    %v24 = vld [vmem:[#allocation2 + $0x18] sm:$0xff]
    %v25 = vld [vmem:[#allocation2 + $0x20] sm:$0xff]
    %v26 = vld [vmem:[#allocation2 + $0x28] sm:$0xff]
    %v27 = vld [vmem:[#allocation2 + $0x30] sm:$0xff]
    %v28 = vld [vmem:[#allocation2 + $0x38] sm:$0xff]
    %29 = vst [vmem:[#allocation5] sm:$0xff] %v21
    %30 = vst [vmem:[#allocation5 + $0x8] sm:$0xff] %v22
    %31 = vst [vmem:[#allocation5 + $0x10] sm:$0xff] %v23
    %32 = vst [vmem:[#allocation5 + $0x18] sm:$0xff] %v24
    %33 = vst [vmem:[#allocation5 + $0x20] sm:$0xff] %v25
    %34 = vst [vmem:[#allocation5 + $0x28] sm:$0xff] %v26
    %35 = vst [vmem:[#allocation5 + $0x30] sm:$0xff] %v27
    %36 = vst [vmem:[#allocation5 + $0x38] sm:$0xff] %v28
    // Predicated region
    $region10: #{tpu_custom_call.1} parent=1 // pred_check
      _
    $region11: #{tpu_custom_call.1} parent=1 // pred_check_branch
      %38 = sbr.rel (0) target = $region13
    $region12: #{tpu_custom_call.1} parent=1 // pred_region
      %s40 = ssub.s32 1024, 1024
      %41 = vsyncadd [#allocation4], %s40
      %s43 = sshll.u32 [#allocation5], 4
      %s44 = int_to_ptr.vmem [resolvable:$true] %s43
      %46 = dma.vmem_to_hbm [thread:$0]  %s44, 1024, %s1, [#allocation4]
    $region13: #{tpu_custom_call.1} parent=1 // pred_fallthru
      _
    // Predicated region
    $region14: #{tpu_custom_call.1} parent=1 // pred_check
      _
    $region15: #{tpu_custom_call.1} parent=1 // pred_check_branch
      %48 = sbr.rel (0) target = $region17
    $region16: #{tpu_custom_call.1} parent=1 // pred_region
      %49 = dma.done [#allocation4], 1024
    $region17: #{tpu_custom_call.1} parent=1 // pred_fallthru
      _
    %50 = vsyncpa [#allocation3], 1
    %51 = vsyncpa [#allocation4], 1

</llo_original>
